<compile_context>
chip_gen: v7x
topology: tpu7x:2x2x1
jax: 0.10.0
libtpu: 0.0.40
codegen_flags: <defaults>
</compile_context>

<pallas_src>
import jax
import jax.numpy as jnp
from jax.experimental import pallas as pl
from jax.experimental.pallas import tpu as pltpu


def mlp2_kernel(x_ref, w1_ref, b1_ref, w2_ref, b2_ref, o_ref):
    # x_ref : (B, F) f32 in VMEM       (activations, vector path)
    # w*_ref: (F, F) f32 in SMEM       (PyTorch (out_features, in_features) layout)
    # b*_ref: (F,)   f32 in SMEM
    # o_ref : (B, F) f32 in VMEM
    x = x_ref[...]
    B, F = x.shape                                   # static (2, 3)

    # lane index of each output element; used to place per-output columns
    # without any transpose / relayout of the tiny weight matrices.
    lane = jax.lax.broadcasted_iota(jnp.int32, (B, F), 1)

    def dense(inp, w_ref, b_ref):
        """y[b, o] = b[o] + sum_i inp[b, i] * w[o, i]  (PyTorch Linear)."""
        out = jnp.zeros((B, F), dtype=jnp.float32)
        for o in range(F):                           # F == 3 -> fully unrolled
            # scalar weight (SMEM) splat * activation column (VMEM) -> VPU FMA
            acc = inp[:, 0:1] * w_ref[o, 0]          # (B, 1)
            for i in range(1, F):
                acc = acc + inp[:, i:i + 1] * w_ref[o, i]
            acc = acc + b_ref[o]
            out = jnp.where(lane == o, acc, out)     # drop column into lane o
        return out

    y1 = dense(x, w1_ref, b1_ref)                    # layers1
    y2 = dense(y1, w2_ref, b2_ref)                   # layers2
    o_ref[...] = y2.astype(o_ref.dtype)


def two_layer_mlp(x, w1, b1, w2, b2):
    """Equivalent of: Linear(3,3) -> Linear(3,3) -> (torch.flatten(x, 0),).

    x      : (B, 3) float32
    w1, w2 : (3, 3) PyTorch convention (out_features, in_features)
    b1, b2 : (3,)
    """
    B, F = x.shape

    # Single custom call, no grid: everything fits trivially on-chip, and a
    # 1-point grid would only add per-step pipeline bookkeeping.
    y = pl.pallas_call(
        mlp2_kernel,
        out_shape=jax.ShapeDtypeStruct((B, F), x.dtype),
        in_specs=[
            pl.BlockSpec(memory_space=pltpu.MemorySpace.VMEM),   # x
            pl.BlockSpec(memory_space=pltpu.MemorySpace.SMEM),   # w1
            pl.BlockSpec(memory_space=pltpu.MemorySpace.SMEM),   # b1
            pl.BlockSpec(memory_space=pltpu.MemorySpace.SMEM),   # w2
            pl.BlockSpec(memory_space=pltpu.MemorySpace.SMEM),   # b2
        ],
        out_specs=pl.BlockSpec(memory_space=pltpu.MemorySpace.VMEM),
    )(x, w1, b1, w2, b2)

    # torch.flatten(y, start_dim=0): row-major, metadata-only reshape.
    return (y.reshape(-1),)


if __name__ == "__main__":
    key = jax.random.PRNGKey(0)
    k_x, k_w1, k_b1, k_w2, k_b2 = jax.random.split(key, 5)

    B, F = 2, 3  # Linear(3, 3) implies feature dim 3; small batch of 2.

    x = jax.random.normal(k_x, (B, F), dtype=jnp.float32)

    # Deterministic init mimicking PyTorch's default U(-1/sqrt(fan_in), 1/sqrt(fan_in)).
    bound = 1.0 / jnp.sqrt(jnp.float32(F))
    w1 = jax.random.uniform(k_w1, (F, F), jnp.float32, -bound, bound)
    b1 = jax.random.uniform(k_b1, (F,), jnp.float32, -bound, bound)
    w2 = jax.random.uniform(k_w2, (F, F), jnp.float32, -bound, bound)
    b2 = jax.random.uniform(k_b2, (F,), jnp.float32, -bound, bound)

    out = two_layer_mlp(x, w1, b1, w2, b2)
    jax.block_until_ready(out)

    # Correctness check against a plain-JAX reference of the PyTorch forward.
    ref = ((x @ w1.T + b1) @ w2.T + b2).reshape(-1)
    assert out[0].shape == (B * F,)
    assert jnp.allclose(out[0], ref, atol=1e-5, rtol=1e-5)

    print("KERNEL_OK")
</pallas_src>

<mosaic_0001>
module attributes {stable_mosaic.version = 11 : i64} {
  func.func @mlp2_kernel(%arg0: memref<2x3xf32, #tpu.memory_space<vmem>>, %arg1: memref<3x3xf32, #tpu.memory_space<smem>>, %arg2: memref<3xf32, #tpu.memory_space<smem>>, %arg3: memref<3x3xf32, #tpu.memory_space<smem>>, %arg4: memref<3xf32, #tpu.memory_space<smem>>, %arg5: memref<2x3xf32, #tpu.memory_space<vmem>>) attributes {dimension_semantics = [], scalar_prefetch = 0 : i64, scratch_operands = 0 : i64, tpu.core_type = #tpu.core_type<tc>} {
    %c0 = arith.constant 0 : index
    %c0_0 = arith.constant 0 : index
    %0 = vector.load %arg0[%c0, %c0_0] : memref<2x3xf32, #tpu.memory_space<vmem>>, vector<2x3xf32>
    %1 = tpu.iota {dimensions = array<i32: 1>} : vector<2x3xi32>
    %cst = arith.constant 0.000000e+00 : f32
    %2 = vector.broadcast %cst : f32 to vector<2x3xf32>
    %3 = vector.extract_strided_slice %0 {offsets = [0, 0], sizes = [2, 1], strides = [1, 1]} : vector<2x3xf32> to vector<2x1xf32>
    %c0_1 = arith.constant 0 : index
    %c0_2 = arith.constant 0 : index
    %4 = memref.load %arg1[%c0_1, %c0_2] : memref<3x3xf32, #tpu.memory_space<smem>>
    %5 = vector.broadcast %4 : f32 to vector<2x1xf32>
    %6 = arith.mulf %3, %5 : vector<2x1xf32>
    %7 = vector.extract_strided_slice %0 {offsets = [0, 1], sizes = [2, 1], strides = [1, 1]} : vector<2x3xf32> to vector<2x1xf32>
    %c0_3 = arith.constant 0 : index
    %c1 = arith.constant 1 : index
    %8 = memref.load %arg1[%c0_3, %c1] : memref<3x3xf32, #tpu.memory_space<smem>>
    %9 = vector.broadcast %8 : f32 to vector<2x1xf32>
    %10 = arith.mulf %7, %9 : vector<2x1xf32>
    %11 = arith.addf %6, %10 : vector<2x1xf32>
    %12 = vector.extract_strided_slice %0 {offsets = [0, 2], sizes = [2, 1], strides = [1, 1]} : vector<2x3xf32> to vector<2x1xf32>
    %c0_4 = arith.constant 0 : index
    %c2 = arith.constant 2 : index
    %13 = memref.load %arg1[%c0_4, %c2] : memref<3x3xf32, #tpu.memory_space<smem>>
    %14 = vector.broadcast %13 : f32 to vector<2x1xf32>
    %15 = arith.mulf %12, %14 : vector<2x1xf32>
    %16 = arith.addf %11, %15 : vector<2x1xf32>
    %c0_5 = arith.constant 0 : index
    %17 = memref.load %arg2[%c0_5] : memref<3xf32, #tpu.memory_space<smem>>
    %18 = vector.broadcast %17 : f32 to vector<2x1xf32>
    %19 = arith.addf %16, %18 : vector<2x1xf32>
    %c0_i32 = arith.constant 0 : i32
    %20 = vector.broadcast %c0_i32 : i32 to vector<2x3xi32>
    %21 = arith.cmpi eq, %1, %20 : vector<2x3xi32>
    %22 = vector.shape_cast %19 : vector<2x1xf32> to vector<2x1xf32>
    %23 = vector.broadcast %22 : vector<2x1xf32> to vector<2x3xf32>
    %24 = arith.select %21, %23, %2 : vector<2x3xi1>, vector<2x3xf32>
    %25 = vector.extract_strided_slice %0 {offsets = [0, 0], sizes = [2, 1], strides = [1, 1]} : vector<2x3xf32> to vector<2x1xf32>
    %c1_6 = arith.constant 1 : index
    %c0_7 = arith.constant 0 : index
    %26 = memref.load %arg1[%c1_6, %c0_7] : memref<3x3xf32, #tpu.memory_space<smem>>
    %27 = vector.broadcast %26 : f32 to vector<2x1xf32>
    %28 = arith.mulf %25, %27 : vector<2x1xf32>
    %29 = vector.extract_strided_slice %0 {offsets = [0, 1], sizes = [2, 1], strides = [1, 1]} : vector<2x3xf32> to vector<2x1xf32>
    %c1_8 = arith.constant 1 : index
    %c1_9 = arith.constant 1 : index
    %30 = memref.load %arg1[%c1_8, %c1_9] : memref<3x3xf32, #tpu.memory_space<smem>>
    %31 = vector.broadcast %30 : f32 to vector<2x1xf32>
    %32 = arith.mulf %29, %31 : vector<2x1xf32>
    %33 = arith.addf %28, %32 : vector<2x1xf32>
    %34 = vector.extract_strided_slice %0 {offsets = [0, 2], sizes = [2, 1], strides = [1, 1]} : vector<2x3xf32> to vector<2x1xf32>
    %c1_10 = arith.constant 1 : index
    %c2_11 = arith.constant 2 : index
    %35 = memref.load %arg1[%c1_10, %c2_11] : memref<3x3xf32, #tpu.memory_space<smem>>
    %36 = vector.broadcast %35 : f32 to vector<2x1xf32>
    %37 = arith.mulf %34, %36 : vector<2x1xf32>
    %38 = arith.addf %33, %37 : vector<2x1xf32>
    %c1_12 = arith.constant 1 : index
    %39 = memref.load %arg2[%c1_12] : memref<3xf32, #tpu.memory_space<smem>>
    %40 = vector.broadcast %39 : f32 to vector<2x1xf32>
    %41 = arith.addf %38, %40 : vector<2x1xf32>
    %c1_i32 = arith.constant 1 : i32
    %42 = vector.broadcast %c1_i32 : i32 to vector<2x3xi32>
    %43 = arith.cmpi eq, %1, %42 : vector<2x3xi32>
    %44 = vector.shape_cast %41 : vector<2x1xf32> to vector<2x1xf32>
    %45 = vector.broadcast %44 : vector<2x1xf32> to vector<2x3xf32>
    %46 = arith.select %43, %45, %24 : vector<2x3xi1>, vector<2x3xf32>
    %47 = vector.extract_strided_slice %0 {offsets = [0, 0], sizes = [2, 1], strides = [1, 1]} : vector<2x3xf32> to vector<2x1xf32>
    %c2_13 = arith.constant 2 : index
    %c0_14 = arith.constant 0 : index
    %48 = memref.load %arg1[%c2_13, %c0_14] : memref<3x3xf32, #tpu.memory_space<smem>>
    %49 = vector.broadcast %48 : f32 to vector<2x1xf32>
    %50 = arith.mulf %47, %49 : vector<2x1xf32>
    %51 = vector.extract_strided_slice %0 {offsets = [0, 1], sizes = [2, 1], strides = [1, 1]} : vector<2x3xf32> to vector<2x1xf32>
    %c2_15 = arith.constant 2 : index
    %c1_16 = arith.constant 1 : index
    %52 = memref.load %arg1[%c2_15, %c1_16] : memref<3x3xf32, #tpu.memory_space<smem>>
    %53 = vector.broadcast %52 : f32 to vector<2x1xf32>
    %54 = arith.mulf %51, %53 : vector<2x1xf32>
    %55 = arith.addf %50, %54 : vector<2x1xf32>
    %56 = vector.extract_strided_slice %0 {offsets = [0, 2], sizes = [2, 1], strides = [1, 1]} : vector<2x3xf32> to vector<2x1xf32>
    %c2_17 = arith.constant 2 : index
    %c2_18 = arith.constant 2 : index
    %57 = memref.load %arg1[%c2_17, %c2_18] : memref<3x3xf32, #tpu.memory_space<smem>>
    %58 = vector.broadcast %57 : f32 to vector<2x1xf32>
    %59 = arith.mulf %56, %58 : vector<2x1xf32>
    %60 = arith.addf %55, %59 : vector<2x1xf32>
    %c2_19 = arith.constant 2 : index
    %61 = memref.load %arg2[%c2_19] : memref<3xf32, #tpu.memory_space<smem>>
    %62 = vector.broadcast %61 : f32 to vector<2x1xf32>
    %63 = arith.addf %60, %62 : vector<2x1xf32>
    %c2_i32 = arith.constant 2 : i32
    %64 = vector.broadcast %c2_i32 : i32 to vector<2x3xi32>
    %65 = arith.cmpi eq, %1, %64 : vector<2x3xi32>
    %66 = vector.shape_cast %63 : vector<2x1xf32> to vector<2x1xf32>
    %67 = vector.broadcast %66 : vector<2x1xf32> to vector<2x3xf32>
    %68 = arith.select %65, %67, %46 : vector<2x3xi1>, vector<2x3xf32>
    %cst_20 = arith.constant 0.000000e+00 : f32
    %69 = vector.broadcast %cst_20 : f32 to vector<2x3xf32>
    %70 = vector.extract_strided_slice %68 {offsets = [0, 0], sizes = [2, 1], strides = [1, 1]} : vector<2x3xf32> to vector<2x1xf32>
    %c0_21 = arith.constant 0 : index
    %c0_22 = arith.constant 0 : index
    %71 = memref.load %arg3[%c0_21, %c0_22] : memref<3x3xf32, #tpu.memory_space<smem>>
    %72 = vector.broadcast %71 : f32 to vector<2x1xf32>
    %73 = arith.mulf %70, %72 : vector<2x1xf32>
    %74 = vector.extract_strided_slice %68 {offsets = [0, 1], sizes = [2, 1], strides = [1, 1]} : vector<2x3xf32> to vector<2x1xf32>
    %c0_23 = arith.constant 0 : index
    %c1_24 = arith.constant 1 : index
    %75 = memref.load %arg3[%c0_23, %c1_24] : memref<3x3xf32, #tpu.memory_space<smem>>
    %76 = vector.broadcast %75 : f32 to vector<2x1xf32>
    %77 = arith.mulf %74, %76 : vector<2x1xf32>
    %78 = arith.addf %73, %77 : vector<2x1xf32>
    %79 = vector.extract_strided_slice %68 {offsets = [0, 2], sizes = [2, 1], strides = [1, 1]} : vector<2x3xf32> to vector<2x1xf32>
    %c0_25 = arith.constant 0 : index
    %c2_26 = arith.constant 2 : index
    %80 = memref.load %arg3[%c0_25, %c2_26] : memref<3x3xf32, #tpu.memory_space<smem>>
    %81 = vector.broadcast %80 : f32 to vector<2x1xf32>
    %82 = arith.mulf %79, %81 : vector<2x1xf32>
    %83 = arith.addf %78, %82 : vector<2x1xf32>
    %c0_27 = arith.constant 0 : index
    %84 = memref.load %arg4[%c0_27] : memref<3xf32, #tpu.memory_space<smem>>
    %85 = vector.broadcast %84 : f32 to vector<2x1xf32>
    %86 = arith.addf %83, %85 : vector<2x1xf32>
    %c0_i32_28 = arith.constant 0 : i32
    %87 = vector.broadcast %c0_i32_28 : i32 to vector<2x3xi32>
    %88 = arith.cmpi eq, %1, %87 : vector<2x3xi32>
    %89 = vector.shape_cast %86 : vector<2x1xf32> to vector<2x1xf32>
    %90 = vector.broadcast %89 : vector<2x1xf32> to vector<2x3xf32>
    %91 = arith.select %88, %90, %69 : vector<2x3xi1>, vector<2x3xf32>
    %92 = vector.extract_strided_slice %68 {offsets = [0, 0], sizes = [2, 1], strides = [1, 1]} : vector<2x3xf32> to vector<2x1xf32>
    %c1_29 = arith.constant 1 : index
    %c0_30 = arith.constant 0 : index
    %93 = memref.load %arg3[%c1_29, %c0_30] : memref<3x3xf32, #tpu.memory_space<smem>>
    %94 = vector.broadcast %93 : f32 to vector<2x1xf32>
    %95 = arith.mulf %92, %94 : vector<2x1xf32>
    %96 = vector.extract_strided_slice %68 {offsets = [0, 1], sizes = [2, 1], strides = [1, 1]} : vector<2x3xf32> to vector<2x1xf32>
    %c1_31 = arith.constant 1 : index
    %c1_32 = arith.constant 1 : index
    %97 = memref.load %arg3[%c1_31, %c1_32] : memref<3x3xf32, #tpu.memory_space<smem>>
    %98 = vector.broadcast %97 : f32 to vector<2x1xf32>
    %99 = arith.mulf %96, %98 : vector<2x1xf32>
    %100 = arith.addf %95, %99 : vector<2x1xf32>
    %101 = vector.extract_strided_slice %68 {offsets = [0, 2], sizes = [2, 1], strides = [1, 1]} : vector<2x3xf32> to vector<2x1xf32>
    %c1_33 = arith.constant 1 : index
    %c2_34 = arith.constant 2 : index
    %102 = memref.load %arg3[%c1_33, %c2_34] : memref<3x3xf32, #tpu.memory_space<smem>>
    %103 = vector.broadcast %102 : f32 to vector<2x1xf32>
    %104 = arith.mulf %101, %103 : vector<2x1xf32>
    %105 = arith.addf %100, %104 : vector<2x1xf32>
    %c1_35 = arith.constant 1 : index
    %106 = memref.load %arg4[%c1_35] : memref<3xf32, #tpu.memory_space<smem>>
    %107 = vector.broadcast %106 : f32 to vector<2x1xf32>
    %108 = arith.addf %105, %107 : vector<2x1xf32>
    %c1_i32_36 = arith.constant 1 : i32
    %109 = vector.broadcast %c1_i32_36 : i32 to vector<2x3xi32>
    %110 = arith.cmpi eq, %1, %109 : vector<2x3xi32>
    %111 = vector.shape_cast %108 : vector<2x1xf32> to vector<2x1xf32>
    %112 = vector.broadcast %111 : vector<2x1xf32> to vector<2x3xf32>
    %113 = arith.select %110, %112, %91 : vector<2x3xi1>, vector<2x3xf32>
    %114 = vector.extract_strided_slice %68 {offsets = [0, 0], sizes = [2, 1], strides = [1, 1]} : vector<2x3xf32> to vector<2x1xf32>
    %c2_37 = arith.constant 2 : index
    %c0_38 = arith.constant 0 : index
    %115 = memref.load %arg3[%c2_37, %c0_38] : memref<3x3xf32, #tpu.memory_space<smem>>
    %116 = vector.broadcast %115 : f32 to vector<2x1xf32>
    %117 = arith.mulf %114, %116 : vector<2x1xf32>
    %118 = vector.extract_strided_slice %68 {offsets = [0, 1], sizes = [2, 1], strides = [1, 1]} : vector<2x3xf32> to vector<2x1xf32>
    %c2_39 = arith.constant 2 : index
    %c1_40 = arith.constant 1 : index
    %119 = memref.load %arg3[%c2_39, %c1_40] : memref<3x3xf32, #tpu.memory_space<smem>>
    %120 = vector.broadcast %119 : f32 to vector<2x1xf32>
    %121 = arith.mulf %118, %120 : vector<2x1xf32>
    %122 = arith.addf %117, %121 : vector<2x1xf32>
    %123 = vector.extract_strided_slice %68 {offsets = [0, 2], sizes = [2, 1], strides = [1, 1]} : vector<2x3xf32> to vector<2x1xf32>
    %c2_41 = arith.constant 2 : index
    %c2_42 = arith.constant 2 : index
    %124 = memref.load %arg3[%c2_41, %c2_42] : memref<3x3xf32, #tpu.memory_space<smem>>
    %125 = vector.broadcast %124 : f32 to vector<2x1xf32>
    %126 = arith.mulf %123, %125 : vector<2x1xf32>
    %127 = arith.addf %122, %126 : vector<2x1xf32>
    %c2_43 = arith.constant 2 : index
    %128 = memref.load %arg4[%c2_43] : memref<3xf32, #tpu.memory_space<smem>>
    %129 = vector.broadcast %128 : f32 to vector<2x1xf32>
    %130 = arith.addf %127, %129 : vector<2x1xf32>
    %c2_i32_44 = arith.constant 2 : i32
    %131 = vector.broadcast %c2_i32_44 : i32 to vector<2x3xi32>
    %132 = arith.cmpi eq, %1, %131 : vector<2x3xi32>
    %133 = vector.shape_cast %130 : vector<2x1xf32> to vector<2x1xf32>
    %134 = vector.broadcast %133 : vector<2x1xf32> to vector<2x3xf32>
    %135 = arith.select %132, %134, %113 : vector<2x3xi1>, vector<2x3xf32>
    %c0_45 = arith.constant 0 : index
    %c0_46 = arith.constant 0 : index
    %136 = vector.load %arg5[%c0_45, %c0_46] : memref<2x3xf32, #tpu.memory_space<vmem>>, vector<2x3xf32>
    tpu.vector_store %arg5[%c0_45, %c0_46], %135 {strides = array<i32>} : memref<2x3xf32, #tpu.memory_space<vmem>>, vector<2x3xf32>,
    return
  }
}

</mosaic_0001>

<llo_original>
// kernel: tpu_custom_call.1
$region0: #{tpu_custom_call.1}
  #allocation0 [shape = 'u32[]', space=smem, size = 0x4, offset = 0x4, fixed_abs, tag = 'smem constant byte address 0x4 - core index']
  #allocation1 [shape = 'u32[144,128]{1,0:T(1,128)}', space=vmem, size = 0x12000, scoped, tag = 'internal scratch']
  %s0 = inlined_call_operand.hbm [shape: f32[2,3], index: 0, kind: input, shape index: {}]
  %s1 = inlined_call_operand.hbm [shape: f32[3,3], index: 1, kind: input, shape index: {}]
  %s2 = inlined_call_operand.vmem [shape: f32[3], index: 2, kind: input, shape index: {}]
  %s3 = inlined_call_operand.vmem [shape: f32[3,3], index: 3, kind: input, shape index: {}]
  %s4 = inlined_call_operand.vmem [shape: f32[3], index: 4, kind: input, shape index: {}]
  %s5 = inlined_call_operand.hbm [shape: f32[2,3], index: 5, kind: output, shape index: {}]
  %s6 = sld [smem:[#allocation0]]
  $region50: #{tpu_custom_call.1} parent=0
    _
  %s8 = ssub.s32 1, %s6
  %s9 = scalar_select 0, %s8, %s6
  $region1: #{tpu_custom_call.1} parent=0
    #allocation2 [shape = 'u8[1024]{0}', space=vmem, size = 0x400, scoped, tag = 'input window, operand 0, single buffered']
    #allocation3 [shape = 's32[1]{0}', space=sflag, size = 0x4, scoped, tag = 'scoped memory for tpu_custom_call.1']
    #allocation4 [shape = 's32[1]{0}', space=sflag, size = 0x4, scoped, tag = 'scoped memory for tpu_custom_call.1']
    #allocation5 [shape = 's32[1]{0}', space=sflag, size = 0x4, scoped, tag = 'scoped memory for tpu_custom_call.1']
    #allocation6 [shape = 's32[1]{0}', space=sflag, size = 0x4, scoped, tag = 'scoped memory for tpu_custom_call.1']
    #allocation7 [shape = 'u8[2048]{0}', space=smem, size = 0x800, scoped, tag = 'input window, operand 1, single buffered']
    #allocation8 [shape = 'u8[512]{0}', space=smem, size = 0x200, scoped, tag = 'input window, operand 2, single buffered']
    #allocation9 [shape = 'u8[2048]{0}', space=smem, size = 0x800, scoped, tag = 'input window, operand 3, single buffered']
    #allocation10 [shape = 's32[1]{0}', space=sflag, size = 0x4, scoped, tag = 'scoped memory for tpu_custom_call.1']
    #allocation11 [shape = 'u8[512]{0}', space=smem, size = 0x200, scoped, tag = 'input window, operand 4, single buffered']
    #allocation12 [shape = 'u8[1024]{0}', space=vmem, size = 0x400, scoped, tag = 'output window, operand 0, single buffered']
    %10 = vsyncpa [#allocation3], 0
    %11 = vsyncpa [#allocation5], 0
    %12 = vsyncpa [#allocation6], 0
    %13 = vsyncpa [#allocation10], 0
    %14 = vsyncpa [#allocation4], 0
    // Predicated region
    $region2: #{tpu_custom_call.1} parent=1 // pred_check
      _
    $region3: #{tpu_custom_call.1} parent=1 // pred_check_branch
      %16 = sbr.rel (0) target = $region5
    $region4: #{tpu_custom_call.1} parent=1 // pred_region
      %s18 = ssub.s32 32, 32
      %19 = vsyncadd [#allocation3], %s18
      %s21 = sshll.u32 [#allocation2], 4
      %s22 = int_to_ptr.vmem [resolvable:$true] %s21
      %24 = dma.hbm_to_vmem [thread:$0]  %s0, 32, %s22, [#allocation3]
    $region5: #{tpu_custom_call.1} parent=1 // pred_fallthru
      _
    // Predicated region
    $region6: #{tpu_custom_call.1} parent=1 // pred_check
      _
    $region7: #{tpu_custom_call.1} parent=1 // pred_check_branch
      %26 = sbr.rel (0) target = $region9
    $region8: #{tpu_custom_call.1} parent=1 // pred_region
      %s28 = ssub.s32 64, 64
      %29 = vsyncadd [#allocation5], %s28
      %32 = dma.hbm_to_smem %s1, 64, [#allocation7], [#allocation5]
    $region9: #{tpu_custom_call.1} parent=1 // pred_fallthru
      _
    // Predicated region
    $region10: #{tpu_custom_call.1} parent=1 // pred_check
      _
    $region11: #{tpu_custom_call.1} parent=1 // pred_check_branch
      %34 = sbr.rel (0) target = $region13
    $region12: #{tpu_custom_call.1} parent=1 // pred_region
      %s36 = ssub.s32 16, 16
      %37 = vsyncadd [#allocation6], %s36
      %s39 = sshll.u32 %s2, 4
      %s40 = int_to_ptr.vmem [resolvable:$true] %s39
      %42 = dma.vmem_to_smem %s40, 16, [#allocation8], [#allocation6]
    $region13: #{tpu_custom_call.1} parent=1 // pred_fallthru
      _
    // Predicated region
    $region14: #{tpu_custom_call.1} parent=1 // pred_check
      _
    $region15: #{tpu_custom_call.1} parent=1 // pred_check_branch
      %44 = sbr.rel (0) target = $region17
    $region16: #{tpu_custom_call.1} parent=1 // pred_region
      %s46 = ssub.s32 64, 64
      %47 = vsyncadd [#allocation10], %s46
      %s49 = sshll.u32 %s3, 4
      %s50 = int_to_ptr.vmem [resolvable:$true] %s49
      %52 = dma.vmem_to_smem %s50, 64, [#allocation9], [#allocation10]
    $region17: #{tpu_custom_call.1} parent=1 // pred_fallthru
      _
    // Predicated region
    $region18: #{tpu_custom_call.1} parent=1 // pred_check
      _
    $region19: #{tpu_custom_call.1} parent=1 // pred_check_branch
      %54 = sbr.rel (0) target = $region21
    $region20: #{tpu_custom_call.1} parent=1 // pred_region
      %s56 = ssub.s32 16, 16
      %57 = vsyncadd [#allocation10], %s56
      %s59 = sshll.u32 %s4, 4
      %s60 = int_to_ptr.vmem [resolvable:$true] %s59
      %62 = dma.vmem_to_smem %s60, 16, [#allocation11], [#allocation10]
    $region21: #{tpu_custom_call.1} parent=1 // pred_fallthru
      _
    // Predicated region
    $region22: #{tpu_custom_call.1} parent=1 // pred_check
      _
    $region23: #{tpu_custom_call.1} parent=1 // pred_check_branch
      %64 = sbr.rel (0) target = $region25
    $region24: #{tpu_custom_call.1} parent=1 // pred_region
      %65 = dma.done [#allocation3], 32
    $region25: #{tpu_custom_call.1} parent=1 // pred_fallthru
      _
    // Predicated region
    $region26: #{tpu_custom_call.1} parent=1 // pred_check
      _
    $region27: #{tpu_custom_call.1} parent=1 // pred_check_branch
      %67 = sbr.rel (0) target = $region29
    $region28: #{tpu_custom_call.1} parent=1 // pred_region
      %68 = dma.done [#allocation5], 64
    $region29: #{tpu_custom_call.1} parent=1 // pred_fallthru
      _
    // Predicated region
    $region30: #{tpu_custom_call.1} parent=1 // pred_check
      _
    $region31: #{tpu_custom_call.1} parent=1 // pred_check_branch
      %70 = sbr.rel (0) target = $region33
    $region32: #{tpu_custom_call.1} parent=1 // pred_region
      %71 = dma.done [#allocation6], 16
    $region33: #{tpu_custom_call.1} parent=1 // pred_fallthru
      _
    // Predicated region
    $region34: #{tpu_custom_call.1} parent=1 // pred_check
      _
    $region35: #{tpu_custom_call.1} parent=1 // pred_check_branch
      %73 = sbr.rel (0) target = $region37
    $region36: #{tpu_custom_call.1} parent=1 // pred_region
      %74 = dma.done [#allocation10], 64
    $region37: #{tpu_custom_call.1} parent=1 // pred_fallthru
      _
    // Predicated region
    $region38: #{tpu_custom_call.1} parent=1 // pred_check
      _
    $region39: #{tpu_custom_call.1} parent=1 // pred_check_branch
      %76 = sbr.rel (0) target = $region41
    $region40: #{tpu_custom_call.1} parent=1 // pred_region
      %77 = dma.done [#allocation10], 16
    $region41: #{tpu_custom_call.1} parent=1 // pred_fallthru
      _
    %78 = sfence
    %v79 = vld [vmem:[#allocation2] sm:$0x3]
    %v80 = vlaneseq
    %v81 = vand.u32 %v80, 127
    %s82 = sld [smem:[#allocation7]]
    %v83 = vstv %s82
    %v84 = vmul.f32 %v79, %v83
    %s85 = sld [smem:[#allocation7 + $0x1]]
    %v86 = vstv %s85
    %v87 = vmul.f32 %v79, %v86
    %89 = vrot.lane.b32.xlu0 %v87, 127
    %v90 = vpop.permute.xlu0 %89
    %v92 = vadd.f32 %v84, %v90
    %s93 = sld [smem:[#allocation7 + $0x2]]
    %v94 = vstv %s93
    %v95 = vmul.f32 %v79, %v94
    %97 = vrot.lane.b32.xlu0 %v95, 126
    %v98 = vpop.permute.xlu0 %97
    %v100 = vadd.f32 %v92, %v98
    %s101 = sld [smem:[#allocation8]]
    %v102 = vstv %s101
    %v103 = vadd.f32 %v100, %v102
    %vm104 = vcmp.eq.s32.totalorder %v81, 0
    %106 = vset.pattern.permute.xlu0 0
    %107 = vperm.xlu0 %106, %v103
    %v108 = vpop.permute.xlu0 %107
    %v110 = vsel %vm104, %v108, 0.0
    %s111 = sld [smem:[#allocation7 + $0x80]]
    %v112 = vstv %s111
    %v113 = vmul.f32 %v79, %v112
    %s114 = sld [smem:[#allocation7 + $0x81]]
    %v115 = vstv %s114
    %v116 = vmul.f32 %v79, %v115
    %118 = vrot.lane.b32.xlu0 %v116, 127
    %v119 = vpop.permute.xlu0 %118
    %v121 = vadd.f32 %v113, %v119
    %s122 = sld [smem:[#allocation7 + $0x82]]
    %v123 = vstv %s122
    %v124 = vmul.f32 %v79, %v123
    %126 = vrot.lane.b32.xlu0 %v124, 126
    %v127 = vpop.permute.xlu0 %126
    %v129 = vadd.f32 %v121, %v127
    %s130 = sld [smem:[#allocation8 + $0x1]]
    %v131 = vstv %s130
    %v132 = vadd.f32 %v129, %v131
    %vm133 = vcmp.eq.s32.totalorder %v81, 1
    %135 = vset.pattern.permute.xlu0 0
    %136 = vperm.xlu0 %135, %v132
    %v137 = vpop.permute.xlu0 %136
    %v139 = vsel %vm133, %v137, %v110
    %s140 = sld [smem:[#allocation7 + $0x100]]
    %v141 = vstv %s140
    %v142 = vmul.f32 %v79, %v141
    %s143 = sld [smem:[#allocation7 + $0x101]]
    %v144 = vstv %s143
    %v145 = vmul.f32 %v79, %v144
    %147 = vrot.lane.b32.xlu0 %v145, 127
    %v148 = vpop.permute.xlu0 %147
    %v150 = vadd.f32 %v142, %v148
    %s151 = sld [smem:[#allocation7 + $0x102]]
    %v152 = vstv %s151
    %v153 = vmul.f32 %v79, %v152
    %155 = vrot.lane.b32.xlu0 %v153, 126
    %v156 = vpop.permute.xlu0 %155
    %v158 = vadd.f32 %v150, %v156
    %s159 = sld [smem:[#allocation8 + $0x2]]
    %v160 = vstv %s159
    %v161 = vadd.f32 %v158, %v160
    %vm162 = vcmp.eq.s32.totalorder %v81, 2
    %164 = vset.pattern.permute.xlu0 0
    %165 = vperm.xlu0 %164, %v161
    %v166 = vpop.permute.xlu0 %165
    %v168 = vsel %vm162, %v166, %v139
    %s169 = sld [smem:[#allocation9]]
    %v170 = vstv %s169
    %v171 = vmul.f32 %v168, %v170
    %s172 = sld [smem:[#allocation9 + $0x1]]
    %v173 = vstv %s172
    %v174 = vmul.f32 %v168, %v173
    %176 = vrot.lane.b32.xlu0 %v174, 127
    %v177 = vpop.permute.xlu0 %176
    %v179 = vadd.f32 %v171, %v177
    %s180 = sld [smem:[#allocation9 + $0x2]]
    %v181 = vstv %s180
    %v182 = vmul.f32 %v168, %v181
    %184 = vrot.lane.b32.xlu0 %v182, 126
    %v185 = vpop.permute.xlu0 %184
    %v187 = vadd.f32 %v179, %v185
    %s188 = sld [smem:[#allocation11]]
    %v189 = vstv %s188
    %v190 = vadd.f32 %v187, %v189
    %192 = vset.pattern.permute.xlu0 0
    %193 = vperm.xlu0 %192, %v190
    %v194 = vpop.permute.xlu0 %193
    %v196 = vsel %vm104, %v194, 0.0
    %s197 = sld [smem:[#allocation9 + $0x80]]
    %v198 = vstv %s197
    %v199 = vmul.f32 %v168, %v198
    %s200 = sld [smem:[#allocation9 + $0x81]]
    %v201 = vstv %s200
    %v202 = vmul.f32 %v168, %v201
    %204 = vrot.lane.b32.xlu0 %v202, 127
    %v205 = vpop.permute.xlu0 %204
    %v207 = vadd.f32 %v199, %v205
    %s208 = sld [smem:[#allocation9 + $0x82]]
    %v209 = vstv %s208
    %v210 = vmul.f32 %v168, %v209
    %212 = vrot.lane.b32.xlu0 %v210, 126
    %v213 = vpop.permute.xlu0 %212
    %v215 = vadd.f32 %v207, %v213
    %s216 = sld [smem:[#allocation11 + $0x1]]
    %v217 = vstv %s216
    %v218 = vadd.f32 %v215, %v217
    %220 = vset.pattern.permute.xlu0 0
    %221 = vperm.xlu0 %220, %v218
    %v222 = vpop.permute.xlu0 %221
    %v224 = vsel %vm133, %v222, %v196
    %s225 = sld [smem:[#allocation9 + $0x100]]
    %v226 = vstv %s225
    %v227 = vmul.f32 %v168, %v226
    %s228 = sld [smem:[#allocation9 + $0x101]]
    %v229 = vstv %s228
    %v230 = vmul.f32 %v168, %v229
    %232 = vrot.lane.b32.xlu0 %v230, 127
    %v233 = vpop.permute.xlu0 %232
    %v235 = vadd.f32 %v227, %v233
    %s236 = sld [smem:[#allocation9 + $0x102]]
    %v237 = vstv %s236
    %v238 = vmul.f32 %v168, %v237
    %240 = vrot.lane.b32.xlu0 %v238, 126
    %v241 = vpop.permute.xlu0 %240
    %v243 = vadd.f32 %v235, %v241
    %s244 = sld [smem:[#allocation11 + $0x2]]
    %v245 = vstv %s244
    %v246 = vadd.f32 %v243, %v245
    %248 = vset.pattern.permute.xlu0 0
    %249 = vperm.xlu0 %248, %v246
    %v250 = vpop.permute.xlu0 %249
    %v252 = vsel %vm162, %v250, %v224
    %vm253 = vcmask 17408
    %254 = vst.msk [vmem:[#allocation12] sm:$0x3] %vm253, %v252
    // Predicated region
    $region42: #{tpu_custom_call.1} parent=1 // pred_check
      _
    $region43: #{tpu_custom_call.1} parent=1 // pred_check_branch
      %256 = sbr.rel (0) target = $region45
    $region44: #{tpu_custom_call.1} parent=1 // pred_region
      %s258 = ssub.s32 32, 32
      %259 = vsyncadd [#allocation4], %s258
      %s261 = sshll.u32 [#allocation12], 4
      %s262 = int_to_ptr.vmem [resolvable:$true] %s261
      %264 = dma.vmem_to_hbm [thread:$0]  %s262, 32, %s5, [#allocation4]
    $region45: #{tpu_custom_call.1} parent=1 // pred_fallthru
      _
    // Predicated region
    $region46: #{tpu_custom_call.1} parent=1 // pred_check
      _
    $region47: #{tpu_custom_call.1} parent=1 // pred_check_branch
      %266 = sbr.rel (0) target = $region49
    $region48: #{tpu_custom_call.1} parent=1 // pred_region
      %267 = dma.done [#allocation4], 32
    $region49: #{tpu_custom_call.1} parent=1 // pred_fallthru
      _
    %268 = vsyncpa [#allocation3], 1
    %269 = vsyncpa [#allocation4], 1
    %270 = vsyncpa [#allocation5], 1
    %271 = vsyncpa [#allocation6], 1
    %272 = vsyncpa [#allocation10], 1

</llo_original>
